<compile_context>
chip_gen: v5e
topology: v5e:2x2
jax: 0.10.0
libtpu: 0.0.40
codegen_flags: <defaults>
</compile_context>

<pallas_src>
import functools

import jax
import jax.numpy as jnp
from jax.experimental import pallas as pl
from jax.experimental.pallas import tpu as pltpu

LANES = 128
SUBLANES = 8


def _wmse_kernel(pred_ref, target_ref, out_ref, *,
                 row_block, rows, steps_per_slice, needs_mask):
    c = pl.program_id(0)          # TensorCore slice (parallel axis)
    i = pl.program_id(1)          # reduction step within the slice

    # Output block index depends only on c -> the (8,128) block is resident
    # across the whole reduction axis and acts as the accumulator.
    @pl.when(i == 0)
    def _():
        out_ref[...] = jnp.zeros_like(out_ref)

    # Cast in-kernel (free VPU work under the DMA); accumulate in f32.
    t = target_ref[...].astype(jnp.float32)
    p = pred_ref[...].astype(jnp.float32)
    w = jnp.exp(t * 5.0)          # EUP
    d = p - t                     # VPU
    contrib = w * d * d           # VPU

    if needs_mask:
        # Mask rows past the real data: the partial last tile (unspecified
        # VMEM padding) and the clamped duplicate block of an idle trailing
        # slice step.  jnp.where also squashes any NaN/Inf from garbage.
        step_idx = c * steps_per_slice + i
        row_ids = step_idx * row_block + jax.lax.broadcasted_iota(
            jnp.int32, contrib.shape, 0)
        contrib = jnp.where(row_ids < rows, contrib, 0.0)

    # Fold the tile into one vreg worth of partial sums with pure vreg adds
    # (no per-step cross-lane XLU reduction).
    out_ref[...] += jnp.sum(
        contrib.reshape(row_block // SUBLANES, SUBLANES, LANES), axis=0)


def weighted_mse_loss(pred, target, *, row_block=2048, num_slices=2):
    """mean(exp(target * 5) * (pred - target)**2) via a Pallas TPU kernel."""
    assert pred.shape == target.shape
    n_elems = pred.size

    p_flat = pred.reshape(-1)
    t_flat = target.reshape(-1)

    # Lane-dense (rows, 128) view.  Only pad (a tiny copy) when numel is not
    # a multiple of 128; padded entries are zeros -> exp(0) * 0^2 = 0.
    rem = n_elems % LANES
    if rem:
        pad = LANES - rem
        p_flat = jnp.pad(p_flat, (0, pad))
        t_flat = jnp.pad(t_flat, (0, pad))
    rows = p_flat.size // LANES
    p2 = p_flat.reshape(rows, LANES)
    t2 = t_flat.reshape(rows, LANES)

    # Tile height: a multiple of 8 sublanes, never larger than needed.
    row_block = int(min(row_block, max(SUBLANES, (rows // SUBLANES) * SUBLANES)))
    row_block = (row_block // SUBLANES) * SUBLANES

    steps_total = pl.cdiv(rows, row_block)
    num_slices = int(min(num_slices, steps_total))
    steps_per_slice = pl.cdiv(steps_total, num_slices)

    # Mask only when some tile can read past the real rows (partial last
    # block, or idle trailing steps of the last slice).
    needs_mask = (rows % row_block != 0) or (num_slices * steps_per_slice
                                             != steps_total)

    def in_map(c, i):
        # Clamp so an idle trailing step never indexes past the array; its
        # (duplicated) data is masked to zero inside the kernel.
        return (jnp.minimum(c * steps_per_slice + i, steps_total - 1), 0)

    kernel = functools.partial(
        _wmse_kernel,
        row_block=row_block,
        rows=rows,
        steps_per_slice=steps_per_slice,
        needs_mask=needs_mask,
    )

    partials = pl.pallas_call(
        kernel,
        out_shape=jax.ShapeDtypeStruct((num_slices * SUBLANES, LANES),
                                       jnp.float32),
        grid_spec=pltpu.PrefetchScalarGridSpec(
            num_scalar_prefetch=0,
            grid=(num_slices, steps_per_slice),
            in_specs=[
                pl.BlockSpec((row_block, LANES), in_map),
                pl.BlockSpec((row_block, LANES), in_map),
            ],
            out_specs=pl.BlockSpec((SUBLANES, LANES), lambda c, i: (c, 0)),
        ),
        compiler_params=pltpu.CompilerParams(
            dimension_semantics=("parallel", "arbitrary"),
        ),
    )(p2, t2)

    # Tiny epilogue reduce (num_slices * 8 * 128 values) + true-count mean.
    return jnp.sum(partials) / n_elems


def _reference(pred, target):
    p = pred.astype(jnp.float32)
    t = target.astype(jnp.float32)
    return jnp.mean(jnp.exp(t * 5.0) * (p - t) ** 2)


if __name__ == "__main__":
    key = jax.random.PRNGKey(0)
    k1, k2, k3, k4 = jax.random.split(key, 4)

    # Segmentation-style NCHW prediction / target (numel divisible by 128).
    pred = jax.random.normal(k1, (2, 4, 16, 16), dtype=jnp.float32)
    target = jax.random.uniform(k2, (2, 4, 16, 16), dtype=jnp.float32)
    loss = weighted_mse_loss(pred, target)
    jax.block_until_ready(loss)
    ref = _reference(pred, target)
    assert jnp.allclose(loss, ref, rtol=1e-5, atol=1e-6), (loss, ref)

    # Ragged shape (numel not a multiple of 128) to exercise the masked tail
    # and the multi-slice path.
    pred2 = jax.random.normal(k3, (2, 3, 15, 17), dtype=jnp.float32)
    target2 = jax.random.uniform(k4, (2, 3, 15, 17), dtype=jnp.float32)
    loss2 = weighted_mse_loss(pred2, target2)
    jax.block_until_ready(loss2)
    ref2 = _reference(pred2, target2)
    assert jnp.allclose(loss2, ref2, rtol=1e-5, atol=1e-6), (loss2, ref2)

    # bf16 inputs exercise the in-kernel cast path (bf16 HBM traffic only).
    pred3 = pred.astype(jnp.bfloat16)
    target3 = target.astype(jnp.bfloat16)
    loss3 = weighted_mse_loss(pred3, target3)
    jax.block_until_ready(loss3)
    ref3 = _reference(pred3, target3)
    assert jnp.allclose(loss3, ref3, rtol=1e-4, atol=1e-5), (loss3, ref3)

    print("KERNEL_OK")
</pallas_src>

<mosaic_0001>
module attributes {stable_mosaic.version = 11 : i64} {
  func.func @_wmse_kernel(%arg0: i32, %arg1: i32, %arg2: memref<16x128xf32, #tpu.memory_space<vmem>>, %arg3: memref<16x128xf32, #tpu.memory_space<vmem>>, %arg4: memref<8x128xf32, #tpu.memory_space<vmem>>) attributes {dimension_semantics = [#tpu.dimension_semantics<parallel>, #tpu.dimension_semantics<arbitrary>], iteration_bounds = array<i64: 1, 1>, scalar_prefetch = 0 : i64, scratch_operands = 0 : i64, tpu.core_type = #tpu.core_type<tc>, window_params = [{transform_indices = @transform_0, window_bounds = array<i64: 16, 128>}, {transform_indices = @transform_1, window_bounds = array<i64: 16, 128>}, {transform_indices = @transform_2, window_bounds = array<i64: 8, 128>}]} {
    %c0_i32 = arith.constant 0 : i32
    %0 = arith.cmpi eq, %arg1, %c0_i32 : i32
    %1 = arith.extui %0 : i1 to i32
    %c0_i32_0 = arith.constant 0 : i32
    %2 = arith.cmpi ne, %1, %c0_i32_0 : i32
    scf.if %2 {
      %cst_9 = arith.constant 0.000000e+00 : f32
      %16 = vector.broadcast %cst_9 : f32 to vector<8x128xf32>
      %c0_10 = arith.constant 0 : index
      %c0_11 = arith.constant 0 : index
      %17 = vector.load %arg4[%c0_10, %c0_11] : memref<8x128xf32, #tpu.memory_space<vmem>>, vector<8x128xf32>
      tpu.vector_store %arg4[%c0_10, %c0_11], %16 {strides = array<i32>} : memref<8x128xf32, #tpu.memory_space<vmem>>, vector<8x128xf32>,
    } else {
    }
    %c0 = arith.constant 0 : index
    %c0_1 = arith.constant 0 : index
    %3 = vector.load %arg3[%c0, %c0_1] : memref<16x128xf32, #tpu.memory_space<vmem>>, vector<16x128xf32>
    %c0_2 = arith.constant 0 : index
    %c0_3 = arith.constant 0 : index
    %4 = vector.load %arg2[%c0_2, %c0_3] : memref<16x128xf32, #tpu.memory_space<vmem>>, vector<16x128xf32>
    %cst = arith.constant 5.000000e+00 : f32
    %5 = vector.broadcast %cst : f32 to vector<16x128xf32>
    %6 = arith.mulf %3, %5 : vector<16x128xf32>
    %7 = math.exp %6 : vector<16x128xf32>
    %8 = arith.subf %4, %3 : vector<16x128xf32>
    %9 = arith.mulf %7, %8 : vector<16x128xf32>
    %10 = arith.mulf %9, %8 : vector<16x128xf32>
    %c0_4 = arith.constant 0 : index
    %c0_5 = arith.constant 0 : index
    %11 = vector.load %arg4[%c0_4, %c0_5] : memref<8x128xf32, #tpu.memory_space<vmem>>, vector<8x128xf32>
    %12 = vector.shape_cast %10 : vector<16x128xf32> to vector<2x8x128xf32>
    %cst_6 = arith.constant dense<0.000000e+00> : vector<8x128xf32>
    %13 = vector.multi_reduction <add>, %12, %cst_6 [0] : vector<2x8x128xf32> to vector<8x128xf32>
    %14 = arith.addf %11, %13 : vector<8x128xf32>
    %c0_7 = arith.constant 0 : index
    %c0_8 = arith.constant 0 : index
    %15 = vector.load %arg4[%c0_7, %c0_8] : memref<8x128xf32, #tpu.memory_space<vmem>>, vector<8x128xf32>
    tpu.vector_store %arg4[%c0_7, %c0_8], %14 {strides = array<i32>} : memref<8x128xf32, #tpu.memory_space<vmem>>, vector<8x128xf32>,
    return
  }
  func.func @transform_0(%arg0: i32, %arg1: i32) -> (i32, i32) {
    %c1_i32 = arith.constant 1 : i32
    %0 = arith.muli %arg0, %c1_i32 : i32
    %1 = arith.addi %0, %arg1 : i32
    %c0_i32 = arith.constant 0 : i32
    %2 = arith.minsi %1, %c0_i32 : i32
    %c0_i32_0 = arith.constant 0 : i32
    %c0_i32_1 = arith.constant 0 : i32
    return %2, %c0_i32_0 : i32, i32
  }
  func.func @transform_1(%arg0: i32, %arg1: i32) -> (i32, i32) {
    %c1_i32 = arith.constant 1 : i32
    %0 = arith.muli %arg0, %c1_i32 : i32
    %1 = arith.addi %0, %arg1 : i32
    %c0_i32 = arith.constant 0 : i32
    %2 = arith.minsi %1, %c0_i32 : i32
    %c0_i32_0 = arith.constant 0 : i32
    %c0_i32_1 = arith.constant 0 : i32
    return %2, %c0_i32_0 : i32, i32
  }
  func.func @transform_2(%arg0: i32, %arg1: i32) -> (i32, i32) {
    %c0_i32 = arith.constant 0 : i32
    %c0_i32_0 = arith.constant 0 : i32
    return %arg0, %c0_i32 : i32, i32
  }
}

</mosaic_0001>

<llo_original>
// kernel: tpu_custom_call.1
$region0: #{tpu_custom_call.1}
  #allocation0 [shape = 'u32[]', space=smem, size = 0x4, offset = 0x4, fixed_abs, tag = 'smem constant byte address 0x4 - core index']
  #allocation1 [shape = 'u32[72,128]{1,0:T(1,128)}', space=vmem, size = 0x9000, scoped, tag = 'internal scratch']
  %s0 = inlined_call_operand.hbm [shape: f32[16,128], index: 0, kind: input, shape index: {}]
  %s1 = inlined_call_operand.hbm [shape: f32[16,128], index: 1, kind: input, shape index: {}]
  %s2 = inlined_call_operand.hbm [shape: f32[8,128], index: 2, kind: output, shape index: {}]
  %s3 = sld [smem:[#allocation0]]
  $region30: #{tpu_custom_call.1} parent=0
    _
  %s5 = ssub.s32 1, %s3
  %s6 = scalar_select 0, %s5, %s3
  $region1: #{tpu_custom_call.1} parent=0
    #allocation2 [shape = 'u8[8192]{0}', space=vmem, size = 0x2000, scoped, tag = 'input window, operand 0, single buffered']
    #allocation3 [shape = 's32[1]{0}', space=sflag, size = 0x4, scoped, tag = 'scoped memory for tpu_custom_call.1']
    #allocation4 [shape = 's32[1]{0}', space=sflag, size = 0x4, scoped, tag = 'scoped memory for tpu_custom_call.1']
    #allocation5 [shape = 'u8[8192]{0}', space=vmem, size = 0x2000, scoped, tag = 'input window, operand 1, single buffered']
    #allocation6 [shape = 's32[1]{0}', space=sflag, size = 0x4, scoped, tag = 'scoped memory for tpu_custom_call.1']
    #allocation7 [shape = 'u8[4096]{0}', space=vmem, size = 0x1000, scoped, tag = 'output window, operand 0, single buffered']
    %7 = vsyncpa [#allocation3], 0
    %8 = vsyncpa [#allocation6], 0
    %9 = vsyncpa [#allocation4], 0
    // Predicated region
    $region2: #{tpu_custom_call.1} parent=1 // pred_check
      _
    $region3: #{tpu_custom_call.1} parent=1 // pred_check_branch
      %11 = sbr.rel (0) target = $region5
    $region4: #{tpu_custom_call.1} parent=1 // pred_region
      %s12 = sadd.s32 0, 0
      %p13 = scmp.lt.s32.totalorder %s12, 0
      %s14 = scalar_select %p13, %s12, 0
      %s15 = smul.u32 2, %s14
      %17 = vsyncadd [#allocation3], 0
      %s18 = smul.addr %s15, 8
      %s19 = scalar_lea.hbm %s0, %s18
      %s20 = sshll.u32 %s19, 4
      %s21 = int_to_ptr.hbm [resolvable:$true] %s20
      %s22 = sshll.u32 [#allocation2], 4
      %s23 = int_to_ptr.vmem [resolvable:$true] %s22
      %28 = dma.hbm_to_vmem [thread:$0]  %s21, 256, %s23, [#allocation3], 128, 128, 8
    $region5: #{tpu_custom_call.1} parent=1 // pred_fallthru
      _
    // Predicated region
    $region6: #{tpu_custom_call.1} parent=1 // pred_check
      _
    $region7: #{tpu_custom_call.1} parent=1 // pred_check_branch
      %30 = sbr.rel (0) target = $region9
    $region8: #{tpu_custom_call.1} parent=1 // pred_region
      %s31 = sadd.s32 0, 0
      %p32 = scmp.lt.s32.totalorder %s31, 0
      %s33 = scalar_select %p32, %s31, 0
      %s34 = smul.u32 2, %s33
      %36 = vsyncadd [#allocation6], 0
      %s37 = smul.addr %s34, 8
      %s38 = scalar_lea.hbm %s1, %s37
      %s39 = sshll.u32 %s38, 4
      %s40 = int_to_ptr.hbm [resolvable:$true] %s39
      %s41 = sshll.u32 [#allocation5], 4
      %s42 = int_to_ptr.vmem [resolvable:$true] %s41
      %47 = dma.hbm_to_vmem [thread:$0]  %s40, 256, %s42, [#allocation6], 128, 128, 8
    $region9: #{tpu_custom_call.1} parent=1 // pred_fallthru
      _
    // Predicated region
    $region10: #{tpu_custom_call.1} parent=1 // pred_check
      _
    $region11: #{tpu_custom_call.1} parent=1 // pred_check_branch
      %49 = sbr.rel (0) target = $region13
    $region12: #{tpu_custom_call.1} parent=1 // pred_region
      %51 = dma.done [#allocation3], 256
    $region13: #{tpu_custom_call.1} parent=1 // pred_fallthru
      _
    // Predicated region
    $region14: #{tpu_custom_call.1} parent=1 // pred_check
      _
    $region15: #{tpu_custom_call.1} parent=1 // pred_check_branch
      %53 = sbr.rel (0) target = $region17
    $region16: #{tpu_custom_call.1} parent=1 // pred_region
      %55 = dma.done [#allocation6], 256
    $region17: #{tpu_custom_call.1} parent=1 // pred_fallthru
      _
    %s56 = sadd.s32 0, 0
    %p57 = scmp.lt.s32.totalorder %s56, 0
    %s58 = scalar_select %p57, %s56, 0
    %s59 = smul.u32 2, %s58
    %s60 = sadd.s32 0, 0
    %p61 = scmp.lt.s32.totalorder %s60, 0
    %s62 = scalar_select %p61, %s60, 0
    %s63 = smul.u32 2, %s62
    %p64 = scmp.eq.s32.totalorder 0, 0
    // Predicated region
    $region18: #{tpu_custom_call.1} parent=1 // pred_check
      %p65 = pneg %p64
    $region19: #{tpu_custom_call.1} parent=1 // pred_check_branch
      %67 = sbr.rel (%p65) target = $region21
    $region20: #{tpu_custom_call.1} parent=1 // pred_region
      %68 = vst [vmem:[#allocation7] sm:$0xff] 0.0
    $region21: #{tpu_custom_call.1} parent=1 // pred_fallthru
      _
    %v69 = vld [vmem:[#allocation5] sm:$0xff]
    %v70 = vld [vmem:[#allocation5 + $0x8] sm:$0xff]
    %v71 = vld [vmem:[#allocation2] sm:$0xff]
    %v72 = vld [vmem:[#allocation2 + $0x8] sm:$0xff]
    %v73 = vmul.f32 %v69, 5.0
    %v74 = vmul.f32 %v70, 5.0
    %v75 = vmul.f32 %v73, 1.442695
    %v76 = vpow.pop %v75
    %v77 = vmul.f32 %v74, 1.442695
    %v78 = vpow.pop %v77
    %v79 = vsub.f32 %v71, %v69
    %v80 = vsub.f32 %v72, %v70
    %v81 = vmul.f32 %v76, %v79
    %v82 = vmul.f32 %v78, %v80
    %v83 = vmul.f32 %v81, %v79
    %v84 = vmul.f32 %v82, %v80
    %v85 = vld [vmem:[#allocation7] sm:$0xff]
    %v86 = vadd.f32 %v83, %v84
    %v87 = vadd.f32 %v85, %v86
    %88 = vst [vmem:[#allocation7] sm:$0xff] %v87
    // Predicated region
    $region22: #{tpu_custom_call.1} parent=1 // pred_check
      _
    $region23: #{tpu_custom_call.1} parent=1 // pred_check_branch
      %90 = sbr.rel (0) target = $region25
    $region24: #{tpu_custom_call.1} parent=1 // pred_region
      %92 = vsyncadd [#allocation4], 0
      %s94 = sshll.u32 [#allocation7], 4
      %s95 = int_to_ptr.vmem [resolvable:$true] %s94
      %s96 = sshll.u32 %s2, 4
      %s97 = int_to_ptr.hbm [resolvable:$true] %s96
      %99 = dma.vmem_to_hbm [thread:$0]  %s95, 128, %s97, [#allocation4]
    $region25: #{tpu_custom_call.1} parent=1 // pred_fallthru
      _
    // Predicated region
    $region26: #{tpu_custom_call.1} parent=1 // pred_check
      _
    $region27: #{tpu_custom_call.1} parent=1 // pred_check_branch
      %101 = sbr.rel (0) target = $region29
    $region28: #{tpu_custom_call.1} parent=1 // pred_region
      %103 = dma.done [#allocation4], 128
    $region29: #{tpu_custom_call.1} parent=1 // pred_fallthru
      _
    %104 = vsyncpa [#allocation3], 1
    %105 = vsyncpa [#allocation6], 1
    %106 = vsyncpa [#allocation4], 1

</llo_original>
